<compile_context>
chip_gen: v6e
topology: v6e:2x2x1
jax: 0.10.0
libtpu: 0.0.40
codegen_flags: <defaults>
</compile_context>

<pallas_src>
import functools
import numpy as np

import jax
import jax.numpy as jnp
from jax import lax
from jax.experimental import pallas as pl
from jax.experimental.pallas import tpu as pltpu


# ----------------------------------------------------------------------------
# helpers
# ----------------------------------------------------------------------------
def _pick_tile(n, target, align):
    """Largest multiple of `align` that divides n and is <= target, else n (full dim)."""
    if n <= target:
        return n
    t = (min(target, n) // align) * align
    while t >= align:
        if n % t == 0:
            return t
        t -= align
    return n


_VMEM_FULL = functools.partial(pl.BlockSpec, memory_space=pltpu.MemorySpace.VMEM)


def _whole_call(kernel, out_shape, *args):
    """Grid-less whole-array call, used only for small per-node / per-pair ops."""
    return pl.pallas_call(
        kernel,
        out_shape=out_shape,
        in_specs=[_VMEM_FULL() for _ in args],
        out_specs=_VMEM_FULL(),
    )(*args)


# ----------------------------------------------------------------------------
# kernels
# ----------------------------------------------------------------------------
def dual_linear_kernel(xs_ref, xt_ref, ws_ref, wt_ref, os_ref, ot_ref):
    """Row-tiled X @ W for the student and teacher branches (bf16 feeds the MXU)."""
    xs = xs_ref[...].astype(jnp.bfloat16)
    xt = xt_ref[...].astype(jnp.bfloat16)
    ws = ws_ref[...].astype(jnp.bfloat16)
    wt = wt_ref[...].astype(jnp.bfloat16)
    os_ref[...] = jnp.dot(xs, ws, preferred_element_type=jnp.float32).astype(os_ref.dtype)
    ot_ref[...] = jnp.dot(xt, wt, preferred_element_type=jnp.float32).astype(ot_ref.dtype)


def dual_aggregate_kernel(a_ref, xs_ref, xt_ref, bs_ref, bt_ref, os_ref, ot_ref):
    """Tiled A_hat @ (XW) (+bias) for student AND teacher, sharing one A_hat stream.

    grid = (row tiles i ["parallel"], contraction tiles k ["arbitrary"]).
    The output block is resident across k and used directly as the f32 accumulator.
    """
    k = pl.program_id(1)

    @pl.when(k == 0)
    def _():
        os_ref[...] = jnp.zeros_like(os_ref)
        ot_ref[...] = jnp.zeros_like(ot_ref)

    a = a_ref[...]                                  # bf16 tile of A_hat
    os_ref[...] += jnp.dot(a, xs_ref[...], preferred_element_type=jnp.float32)
    ot_ref[...] += jnp.dot(a, xt_ref[...], preferred_element_type=jnp.float32)

    @pl.when(k == pl.num_programs(1) - 1)
    def _():
        os_ref[...] += bs_ref[...]
        ot_ref[...] += bt_ref[...]


def colstats_kernel(h_ref, sum_ref, sq_ref):
    """Per-column sum and sum-of-squares, accumulated across row tiles (pass 1 of BN)."""
    @pl.when(pl.program_id(0) == 0)
    def _():
        sum_ref[...] = jnp.zeros_like(sum_ref)
        sq_ref[...] = jnp.zeros_like(sq_ref)

    h = h_ref[...]
    sum_ref[...] += jnp.sum(h, axis=0, keepdims=True)
    sq_ref[...] += jnp.sum(h * h, axis=0, keepdims=True)


def bn_prelu_kernel(h_ref, sum_ref, sq_ref, invn_ref, g_ref, b_ref, al_ref, o_ref):
    """Training-mode BatchNorm1d (batch stats) + PReLU, row-tiled (pass 2 of BN)."""
    h = h_ref[...]
    inv_n = invn_ref[...]
    mean = sum_ref[...] * inv_n
    var = jnp.maximum(sq_ref[...] * inv_n - mean * mean, 0.0)
    y = (h - mean) * lax.rsqrt(var + 1e-5) * g_ref[...] + b_ref[...]
    o_ref[...] = jnp.where(y >= 0.0, y, y * al_ref[...])


def dual_l2norm_kernel(s_ref, t_ref, os_ref, ot_ref):
    """Row L2 normalization of student and teacher embeddings (hoisted out of sim)."""
    def _n(v):
        return v * lax.rsqrt(jnp.maximum(jnp.sum(v * v, axis=-1, keepdims=True), 1e-24))
    os_ref[...] = _n(s_ref[...])
    ot_ref[...] = _n(t_ref[...])


def similarity_kernel(s_ref, t_ref, o_ref):
    """Tiled student_n @ teacher_n.T; +10 only on diagonal tiles."""
    sim = lax.dot_general(s_ref[...], t_ref[...], (((1,), (1,)), ((), ())),
                          preferred_element_type=jnp.float32)
    o_ref[...] = sim

    @pl.when(pl.program_id(0) == pl.program_id(1))
    def _():
        m = o_ref.shape[0]
        eye = (lax.broadcasted_iota(jnp.int32, (m, m), 0) ==
               lax.broadcasted_iota(jnp.int32, (m, m), 1)).astype(jnp.float32)
        o_ref[...] += 10.0 * eye


def predictor_kernel(x_ref, w1_ref, b1_ref, g_ref, bt_ref, al_ref, w2_ref, b2_ref, o_ref):
    """student_predictor: Linear -> BatchNorm1d (batch stats) -> PReLU -> Linear."""
    h = jnp.dot(x_ref[...], w1_ref[...], preferred_element_type=jnp.float32) + b1_ref[...]
    mean = jnp.mean(h, axis=0, keepdims=True)
    var = jnp.mean((h - mean) ** 2, axis=0, keepdims=True)
    h = (h - mean) * lax.rsqrt(var + 1e-5) * g_ref[...] + bt_ref[...]
    h = jnp.where(h >= 0.0, h, h * al_ref[...])
    o_ref[...] = jnp.dot(h, w2_ref[...], preferred_element_type=jnp.float32) + b2_ref[...]


def decoder_kernel(e1_ref, e2_ref, w1_ref, b1_ref, w2_ref, b2_ref, o_ref):
    """feature = [e1+e2, e1*e2, e1, e2]; relu(feature@W1+b1) @ W2p + b2p.

    W2/b2 are lane-padded to 128 columns (only column 0 meaningful) so the
    output store is lane-dense instead of a (P,1) masked store.
    """
    e1 = e1_ref[...]
    e2 = e2_ref[...]
    feat = jnp.concatenate([e1 + e2, e1 * e2, e1, e2], axis=1)   # single K=4d matmul
    h = jnp.dot(feat, w1_ref[...], preferred_element_type=jnp.float32) + b1_ref[...]
    h = jnp.maximum(h, 0.0)
    o_ref[...] = jnp.dot(h, w2_ref[...], preferred_element_type=jnp.float32) + b2_ref[...]


def masked_pair_loss_kernel(p1_ref, t2_ref, p2_ref, t1_ref, keep_ref, o_ref):
    """(loss_fn(p1,t2)+loss_fn(p2,t1)) masked mean over kept knn edges; loss_fn=2-2cos."""
    def _n(v):
        return v * lax.rsqrt(jnp.maximum(jnp.sum(v * v, axis=-1, keepdims=True), 1e-24))
    l1 = 2.0 - 2.0 * jnp.sum(_n(p1_ref[...]) * _n(t2_ref[...]), axis=-1, keepdims=True)
    l2 = 2.0 - 2.0 * jnp.sum(_n(p2_ref[...]) * _n(t1_ref[...]), axis=-1, keepdims=True)
    keep = keep_ref[...]
    total = jnp.sum((l1 + l2) * keep)
    cnt = jnp.maximum(jnp.sum(keep), 1.0)
    o_ref[...] = jnp.broadcast_to(total / cnt, (1, 1))


# ----------------------------------------------------------------------------
# tiled wrappers
# ----------------------------------------------------------------------------
_VMEM_LIMIT = 32 * 1024 * 1024   # safe on v5e/v6e/v7x; re-derive tiles for v7x (64 MiB phys)


def dual_gcn_layer(a_bf16, h_s, h_t, lp_s, lp_t, *, row_tile=128, k_tile=128):
    """One GCNConv + BatchNorm1d + PReLU layer for both student and teacher."""
    n, f = h_s.shape
    d = lp_s["w"].shape[1]
    tm = _pick_tile(n, row_tile, 8)
    tk = _pick_tile(n, k_tile, 128)
    ni, nk = n // tm, n // tk

    # 1) XW for both branches (row-tiled, bf16 outputs feed the aggregation stream).
    xw_s, xw_t = pl.pallas_call(
        dual_linear_kernel,
        grid=(ni,),
        in_specs=[pl.BlockSpec((tm, f), lambda i: (i, 0)),
                  pl.BlockSpec((tm, f), lambda i: (i, 0)),
                  pl.BlockSpec((f, d), lambda i: (0, 0)),
                  pl.BlockSpec((f, d), lambda i: (0, 0))],
        out_specs=[pl.BlockSpec((tm, d), lambda i: (i, 0)),
                   pl.BlockSpec((tm, d), lambda i: (i, 0))],
        out_shape=[jax.ShapeDtypeStruct((n, d), jnp.bfloat16),
                   jax.ShapeDtypeStruct((n, d), jnp.bfloat16)],
        compiler_params=pltpu.CompilerParams(dimension_semantics=("parallel",)),
    )(h_s, h_t, lp_s["w"], lp_t["w"])

    # 2) A_hat @ XW (+bias), one A_hat HBM stream shared by both branches.
    hpre_s, hpre_t = pl.pallas_call(
        dual_aggregate_kernel,
        grid=(ni, nk),
        in_specs=[pl.BlockSpec((tm, tk), lambda i, k: (i, k)),
                  pl.BlockSpec((tk, d), lambda i, k: (k, 0)),
                  pl.BlockSpec((tk, d), lambda i, k: (k, 0)),
                  pl.BlockSpec((1, d), lambda i, k: (0, 0)),
                  pl.BlockSpec((1, d), lambda i, k: (0, 0))],
        out_specs=[pl.BlockSpec((tm, d), lambda i, k: (i, 0)),
                   pl.BlockSpec((tm, d), lambda i, k: (i, 0))],
        out_shape=[jax.ShapeDtypeStruct((n, d), jnp.float32),
                   jax.ShapeDtypeStruct((n, d), jnp.float32)],
        compiler_params=pltpu.CompilerParams(
            dimension_semantics=("parallel", "arbitrary"),
            vmem_limit_bytes=_VMEM_LIMIT),
    )(a_bf16, xw_s, xw_t, lp_s["b"], lp_t["b"])

    # 3+4) two-pass BatchNorm (batch statistics over all N rows) + PReLU.
    inv_n = jnp.full((1, 1), 1.0 / n, jnp.float32)
    outs = []
    for hpre, lp in ((hpre_s, lp_s), (hpre_t, lp_t)):
        col_sum, col_sq = pl.pallas_call(
            colstats_kernel,
            grid=(ni,),
            in_specs=[pl.BlockSpec((tm, d), lambda i: (i, 0))],
            out_specs=[pl.BlockSpec((1, d), lambda i: (0, 0)),
                       pl.BlockSpec((1, d), lambda i: (0, 0))],
            out_shape=[jax.ShapeDtypeStruct((1, d), jnp.float32),
                       jax.ShapeDtypeStruct((1, d), jnp.float32)],
            compiler_params=pltpu.CompilerParams(dimension_semantics=("arbitrary",)),
        )(hpre)

        h = pl.pallas_call(
            bn_prelu_kernel,
            grid=(ni,),
            in_specs=[pl.BlockSpec((tm, d), lambda i: (i, 0)),
                      pl.BlockSpec((1, d), lambda i: (0, 0)),
                      pl.BlockSpec((1, d), lambda i: (0, 0)),
                      pl.BlockSpec((1, 1), lambda i: (0, 0)),
                      pl.BlockSpec((1, d), lambda i: (0, 0)),
                      pl.BlockSpec((1, d), lambda i: (0, 0)),
                      pl.BlockSpec((1, 1), lambda i: (0, 0))],
            out_specs=pl.BlockSpec((tm, d), lambda i: (i, 0)),
            out_shape=jax.ShapeDtypeStruct((n, d), jnp.float32),
            compiler_params=pltpu.CompilerParams(dimension_semantics=("parallel",)),
        )(hpre, col_sum, col_sq, inv_n, lp["gamma"], lp["beta"], lp["alpha"])
        outs.append(h)
    return outs[0], outs[1]


def dual_l2norm(s, t, *, row_tile=128):
    n, d = s.shape
    tm = _pick_tile(n, row_tile, 8)
    ni = n // tm
    return pl.pallas_call(
        dual_l2norm_kernel,
        grid=(ni,),
        in_specs=[pl.BlockSpec((tm, d), lambda i: (i, 0)),
                  pl.BlockSpec((tm, d), lambda i: (i, 0))],
        out_specs=[pl.BlockSpec((tm, d), lambda i: (i, 0)),
                   pl.BlockSpec((tm, d), lambda i: (i, 0))],
        out_shape=[jax.ShapeDtypeStruct((n, d), jnp.float32),
                   jax.ShapeDtypeStruct((n, d), jnp.float32)],
        compiler_params=pltpu.CompilerParams(dimension_semantics=("parallel",)),
    )(s, t)


def similarity_tiled(s_n, t_n, *, tile=128):
    n, d = s_n.shape
    t = _pick_tile(n, tile, 128)   # square tiles so diagonal tiles are i == j
    ni = n // t
    return pl.pallas_call(
        similarity_kernel,
        grid=(ni, ni),
        in_specs=[pl.BlockSpec((t, d), lambda i, j: (i, 0)),
                  pl.BlockSpec((t, d), lambda i, j: (j, 0))],
        out_specs=pl.BlockSpec((t, t), lambda i, j: (i, j)),
        out_shape=jax.ShapeDtypeStruct((n, n), jnp.float32),
        compiler_params=pltpu.CompilerParams(
            dimension_semantics=("parallel", "parallel"),
            vmem_limit_bytes=_VMEM_LIMIT),
    )(s_n, t_n)


# ----------------------------------------------------------------------------
# plain-JAX glue (parameter setup, adjacency, k-means, indexing)
# ----------------------------------------------------------------------------
def _xavier(key, fan_in, fan_out):
    bound = float(np.sqrt(6.0 / (fan_in + fan_out)))
    return jax.random.uniform(key, (fan_in, fan_out), jnp.float32, -bound, bound)


def init_params(key, layer_config, pred_hid, decoder_dim1):
    ks = iter(jax.random.split(key, 16))
    enc = []
    for i in range(1, len(layer_config)):
        din, dout = layer_config[i - 1], layer_config[i]
        enc.append(dict(
            w=_xavier(next(ks), din, dout),
            b=jnp.zeros((1, dout), jnp.float32),
            gamma=jnp.ones((1, dout), jnp.float32),
            beta=jnp.zeros((1, dout), jnp.float32),
            alpha=jnp.full((1, 1), 0.25, jnp.float32),
        ))
    rep = layer_config[-1]
    pred = dict(
        w1=_xavier(next(ks), rep, pred_hid),
        b1=jnp.full((1, pred_hid), 0.01, jnp.float32),
        gamma=jnp.ones((1, pred_hid), jnp.float32),
        beta=jnp.zeros((1, pred_hid), jnp.float32),
        alpha=jnp.full((1, 1), 0.25, jnp.float32),
        w2=_xavier(next(ks), pred_hid, rep),
        b2=jnp.full((1, rep), 0.01, jnp.float32),
    )
    dec = dict(
        w1=_xavier(next(ks), rep * 4, decoder_dim1),
        b1=jnp.zeros((1, decoder_dim1), jnp.float32),
        w2=_xavier(next(ks), decoder_dim1, 1),
        b2=jnp.zeros((1, 1), jnp.float32),
    )
    teacher = [dict(layer) for layer in enc]   # deepcopy of the student encoder
    return dict(student_encoder=enc, teacher_encoder=teacher, predictor=pred, decoder=dec)


def gcn_norm_dense(edge_index, n):
    # A_hat = D^{-1/2} (A + I) D^{-1/2}; messages flow src (row 0) -> dst (row 1).
    a = jnp.zeros((n, n), jnp.float32).at[edge_index[1], edge_index[0]].add(1.0)
    a = a + jnp.eye(n, dtype=jnp.float32)
    deg = jnp.sum(a, axis=1)
    dinv = jnp.where(deg > 0, 1.0 / jnp.sqrt(deg), 0.0)
    return a * dinv[:, None] * dinv[None, :]


def kmeans_labels(x, k, niter, seed):
    # TODO(synk): faiss.Kmeans has no Pallas equivalent; approximated with plain-JAX Lloyd's k-means.
    key = jax.random.PRNGKey(seed)
    idx = jax.random.choice(key, x.shape[0], (k,), replace=False)
    cent = x[idx]
    for _ in range(niter):
        dist = jnp.sum((x[:, None, :] - cent[None, :, :]) ** 2, axis=-1)
        lab = jnp.argmin(dist, axis=1)
        onehot = jax.nn.one_hot(lab, k, dtype=jnp.float32)
        counts = onehot.sum(axis=0)
        sums = onehot.T @ x
        cent = jnp.where(counts[:, None] > 0, sums / jnp.maximum(counts[:, None], 1.0), cent)
    dist = jnp.sum((x[:, None, :] - cent[None, :, :]) ** 2, axis=-1)
    return jnp.argmin(dist, axis=1)


def neighbor_edges(adj_dense, student_n, teacher_n, top_k, args):
    """Returns (rows, cols, keep) for the N*top_k knn candidate edges."""
    n = student_n.shape[0]
    sim = similarity_tiled(student_n, teacher_n)
    _, I_knn = lax.top_k(sim, top_k)

    labels = [kmeans_labels(teacher_n, args["num_centroids"], args["clus_num_iters"], s + 1234)
              for s in range(args["num_kmeans"])]
    close = jnp.zeros((n, top_k), jnp.bool_)
    for lab in labels:
        close = close | (lab[:, None] == lab[I_knn])

    rows = jnp.repeat(jnp.arange(n), top_k)
    cols = I_knn.reshape(-1)
    # locality: knn edge also in adj; globality: knn edge with matching cluster label
    keep = (adj_dense[rows, cols] > 0) | close.reshape(-1)
    return rows, cols, keep


# ----------------------------------------------------------------------------
# forward
# ----------------------------------------------------------------------------
def mgcl_forward(params, x, y, edge_index, inp, args):
    del y  # unused by the reference forward; kept for signature parity
    n = x.shape[0]
    a_hat = gcn_norm_dense(edge_index, n)
    a_bf16 = a_hat.astype(jnp.bfloat16)   # stream the N^2 operand in bf16 (f32 accumulate)

    # fused student/teacher encoders (teacher is the no-grad EMA copy)
    h_s, h_t = x, x
    for lp_s, lp_t in zip(params["student_encoder"], params["teacher_encoder"]):
        h_s, h_t = dual_gcn_layer(a_bf16, h_s, h_t, lp_s, lp_t)
    student, teacher = h_s, h_t

    ent1 = student[inp[0]]
    ent2 = student[inp[1]]

    p = params["predictor"]
    pred = _whole_call(predictor_kernel,
                       jax.ShapeDtypeStruct(student.shape, jnp.float32),
                       student, p["w1"], p["b1"], p["gamma"], p["beta"], p["alpha"],
                       p["w2"], p["b2"])

    d = params["decoder"]
    w2p = jnp.pad(d["w2"], ((0, 0), (0, 127)))   # lane-pad so the logit store is dense
    b2p = jnp.pad(d["b2"], ((0, 0), (0, 127)))
    log_pad = _whole_call(decoder_kernel,
                          jax.ShapeDtypeStruct((ent1.shape[0], 128), jnp.float32),
                          ent1, ent2, d["w1"], d["b1"], w2p, b2p)
    log = log_pad[:, :1]

    # neighbor selection on L2-normalized embeddings (normalization hoisted out)
    student_n, teacher_n = dual_l2norm(student, teacher)
    adj_dense = jnp.zeros((n, n), jnp.float32).at[edge_index[0], edge_index[1]].add(1.0)
    rows, cols, keep = neighbor_edges(adj_dense, student_n, teacher_n, args["topk"], args)

    # BYOL-style loss computed on device with a keep mask (== mean over kept edges),
    # dispatched BEFORE the host extraction of `ind` so nothing is gated on a sync.
    keep_f = keep.astype(jnp.float32)[:, None]
    loss = _whole_call(masked_pair_loss_kernel,
                       jax.ShapeDtypeStruct((1, 1), jnp.float32),
                       pred[rows], teacher[cols], pred[cols], teacher[rows], keep_f)[0, 0]

    # coalesce()._indices(): row-major sorted indices with data-dependent nnz.
    # TODO(synk): dynamic nnz has no jit-able equivalent; host nonzero kept only for `ind`.
    pos_mask = jnp.zeros((n, n), jnp.bool_).at[rows, cols].set(keep)
    r, c = np.nonzero(np.asarray(pos_mask))
    ind = jnp.asarray(np.stack([r, c]).astype(np.int32))

    return pred, ind, args["topk"], log, loss


# ----------------------------------------------------------------------------
# example run
# ----------------------------------------------------------------------------
if __name__ == "__main__":
    key = jax.random.PRNGKey(0)
    kx, ky, ki1, ki2, kp = jax.random.split(key, 5)

    N, F_in = 256, 32
    layer_config = [F_in, 64, 32]
    args = dict(topk=4, num_centroids=8, num_kmeans=2, clus_num_iters=3,
                pred_hid=64, decoder_dim1=32)

    x = jax.random.normal(kx, (N, F_in), jnp.float32)
    y = jax.random.normal(ky, (N, F_in), jnp.float32)

    # symmetric ring graph
    src = jnp.arange(N, dtype=jnp.int32)
    dst = (src + 1) % N
    edge_index = jnp.stack([jnp.concatenate([src, dst]), jnp.concatenate([dst, src])])

    P = 16
    inp = jnp.stack([jax.random.randint(ki1, (P,), 0, N, jnp.int32),
                     jax.random.randint(ki2, (P,), 0, N, jnp.int32)])

    params = init_params(kp, layer_config, args["pred_hid"], args["decoder_dim1"])

    pred, ind, k, log, loss = mgcl_forward(params, x, y, edge_index, inp, args)
    jax.block_until_ready((pred, ind, log, loss))
    print("KERNEL_OK")
</pallas_src>

<mosaic_0001>
module attributes {stable_mosaic.version = 11 : i64} {
  func.func @dual_linear_kernel(%arg0: i32, %arg1: memref<128x32xf32, #tpu.memory_space<vmem>>, %arg2: memref<128x32xf32, #tpu.memory_space<vmem>>, %arg3: memref<32x64xf32, #tpu.memory_space<vmem>>, %arg4: memref<32x64xf32, #tpu.memory_space<vmem>>, %arg5: memref<128x64xbf16, #tpu.memory_space<vmem>>, %arg6: memref<128x64xbf16, #tpu.memory_space<vmem>>) attributes {dimension_semantics = [#tpu.dimension_semantics<parallel>], iteration_bounds = array<i64: 2>, scalar_prefetch = 0 : i64, scratch_operands = 0 : i64, tpu.core_type = #tpu.core_type<tc>, window_params = [{transform_indices = @transform_0, window_bounds = array<i64: 128, 32>}, {transform_indices = @transform_1, window_bounds = array<i64: 128, 32>}, {pipeline_mode = #tpu.pipeline_mode<synchronous>, transform_indices = @transform_2, window_bounds = array<i64: 32, 64>}, {pipeline_mode = #tpu.pipeline_mode<synchronous>, transform_indices = @transform_3, window_bounds = array<i64: 32, 64>}, {transform_indices = @transform_4, window_bounds = array<i64: 128, 64>}, {transform_indices = @transform_5, window_bounds = array<i64: 128, 64>}]} {
    %c0 = arith.constant 0 : index
    %c0_0 = arith.constant 0 : index
    %0 = vector.load %arg1[%c0, %c0_0] : memref<128x32xf32, #tpu.memory_space<vmem>>, vector<128x32xf32>
    %1 = arith.truncf %0 : vector<128x32xf32> to vector<128x32xbf16>
    %c0_1 = arith.constant 0 : index
    %c0_2 = arith.constant 0 : index
    %2 = vector.load %arg2[%c0_1, %c0_2] : memref<128x32xf32, #tpu.memory_space<vmem>>, vector<128x32xf32>
    %3 = arith.truncf %2 : vector<128x32xf32> to vector<128x32xbf16>
    %c0_3 = arith.constant 0 : index
    %c0_4 = arith.constant 0 : index
    %4 = vector.load %arg3[%c0_3, %c0_4] : memref<32x64xf32, #tpu.memory_space<vmem>>, vector<32x64xf32>
    %5 = arith.truncf %4 : vector<32x64xf32> to vector<32x64xbf16>
    %c0_5 = arith.constant 0 : index
    %c0_6 = arith.constant 0 : index
    %6 = vector.load %arg4[%c0_5, %c0_6] : memref<32x64xf32, #tpu.memory_space<vmem>>, vector<32x64xf32>
    %7 = arith.truncf %6 : vector<32x64xf32> to vector<32x64xbf16>
    %cst = arith.constant dense<0.000000e+00> : vector<128x64xf32>
    %8 = tpu.matmul %1, %5, %cst {dimension_numbers = #tpu.dot_dimension_numbers<[1], [0], [0], [1], [0, 0, 1, 1], [], []>} : vector<128x32xbf16>, vector<32x64xbf16>, vector<128x64xf32> -> vector<128x64xf32>
    %9 = arith.truncf %8 : vector<128x64xf32> to vector<128x64xbf16>
    %c0_7 = arith.constant 0 : index
    %c0_8 = arith.constant 0 : index
    %10 = vector.load %arg5[%c0_7, %c0_8] : memref<128x64xbf16, #tpu.memory_space<vmem>>, vector<128x64xbf16>
    tpu.vector_store %arg5[%c0_7, %c0_8], %9 {strides = array<i32>} : memref<128x64xbf16, #tpu.memory_space<vmem>>, vector<128x64xbf16>,
    %cst_9 = arith.constant dense<0.000000e+00> : vector<128x64xf32>
    %11 = tpu.matmul %3, %7, %cst_9 {dimension_numbers = #tpu.dot_dimension_numbers<[1], [0], [0], [1], [0, 0, 1, 1], [], []>} : vector<128x32xbf16>, vector<32x64xbf16>, vector<128x64xf32> -> vector<128x64xf32>
    %12 = arith.truncf %11 : vector<128x64xf32> to vector<128x64xbf16>
    %c0_10 = arith.constant 0 : index
    %c0_11 = arith.constant 0 : index
    %13 = vector.load %arg6[%c0_10, %c0_11] : memref<128x64xbf16, #tpu.memory_space<vmem>>, vector<128x64xbf16>
    tpu.vector_store %arg6[%c0_10, %c0_11], %12 {strides = array<i32>} : memref<128x64xbf16, #tpu.memory_space<vmem>>, vector<128x64xbf16>,
    return
  }
  func.func @transform_0(%arg0: i32) -> (i32, i32) {
    %c0_i32 = arith.constant 0 : i32
    %c0_i32_0 = arith.constant 0 : i32
    return %arg0, %c0_i32 : i32, i32
  }
  func.func @transform_1(%arg0: i32) -> (i32, i32) {
    %c0_i32 = arith.constant 0 : i32
    %c0_i32_0 = arith.constant 0 : i32
    return %arg0, %c0_i32 : i32, i32
  }
  func.func @transform_2(%arg0: i32) -> (i32, i32) {
    %c0_i32 = arith.constant 0 : i32
    %c0_i32_0 = arith.constant 0 : i32
    %c0_i32_1 = arith.constant 0 : i32
    return %c0_i32, %c0_i32_0 : i32, i32
  }
  func.func @transform_3(%arg0: i32) -> (i32, i32) {
    %c0_i32 = arith.constant 0 : i32
    %c0_i32_0 = arith.constant 0 : i32
    %c0_i32_1 = arith.constant 0 : i32
    return %c0_i32, %c0_i32_0 : i32, i32
  }
  func.func @transform_4(%arg0: i32) -> (i32, i32) {
    %c0_i32 = arith.constant 0 : i32
    %c0_i32_0 = arith.constant 0 : i32
    return %arg0, %c0_i32 : i32, i32
  }
  func.func @transform_5(%arg0: i32) -> (i32, i32) {
    %c0_i32 = arith.constant 0 : i32
    %c0_i32_0 = arith.constant 0 : i32
    return %arg0, %c0_i32 : i32, i32
  }
}

</mosaic_0001>

<llo_original>
// kernel: tpu_custom_call.1
$region0: #{tpu_custom_call.1}
  #allocation0 [shape = 'u32[]', space=smem, size = 0x4, offset = 0x4, fixed_abs, tag = 'smem constant byte address 0x4 - core index']
  #allocation1 [shape = 'u32[144,128]{1,0:T(1,128)}', space=vmem, size = 0x12000, scoped, tag = 'internal scratch']
  %s0 = inlined_call_operand.vmem [shape: f32[256,32], index: 0, kind: input, shape index: {}]
  %s1 = inlined_call_operand.vmem [shape: f32[256,32], index: 1, kind: input, shape index: {}]
  %s2 = inlined_call_operand.vmem [shape: f32[32,64], index: 2, kind: input, shape index: {}]
  %s3 = inlined_call_operand.vmem [shape: f32[32,64], index: 3, kind: input, shape index: {}]
  %s4 = inlined_call_operand.vmem [shape: bf16[256,64], index: 4, kind: output, shape index: {0}]
  %s5 = inlined_call_operand.vmem [shape: bf16[256,64], index: 5, kind: output, shape index: {1}]
  %6 = xla_tuple %s4, %s5
  %s7 = sld [smem:[#allocation0]]
  $region57: #{tpu_custom_call.1} parent=0
    _
  %s9 = ssub.s32 1, %s7
  %s10 = scalar_select 0, %s9, %s7
  loop: start=0, step=1, limit=4
  $region2: #{tpu_custom_call.1} parent=0 // loop_pre_header
    _
  $region3: #{tpu_custom_call.1} parent=0 // loop_header
    %s12 = sphi 0, %s16
    %p13 = scmp.ge.s32.totalorder %s12, 4
    %s22 = sphi 0, %s24
    %s25 = sphi 0, %s22
    %s26 = sphi 0, %s25
    %s42 = sphi 0, %s26
    %s48 = sphi 0, %s50
    %s51 = sphi 0, %s48
    %s52 = sphi 0, %s51
    %s68 = sphi 0, %s52
    %s72 = sphi 0, %s72
    %s74 = sphi 0, %s72
    %s75 = sphi 0, %s74
    %s89 = sphi 0, %s75
    %s93 = sphi 0, %s93
    %s95 = sphi 0, %s93
    %s96 = sphi 0, %s95
    %s110 = sphi 0, %s96
    %s116 = sphi 0, %s118
    %s119 = sphi 0, %s116
    %s120 = sphi 0, %s119
    %s136 = sphi 0, %s120
    %s142 = sphi 0, %s144
    %s145 = sphi 0, %s142
    %s146 = sphi 0, %s145
    %s162 = sphi 0, %s146
  $region4: #{tpu_custom_call.1} parent=0 // loop_header_branch
    %15 = sbr.rel (%p13) target = $region8
  $region5: #{tpu_custom_call.1} parent=0 // loop_body
    %s17 = ssub.s32 %s12, 1
    %s18 = ssub.s32 %s12, 2
    %s19 = sadd.s32 %s12, 1
    %s20 = ssub.s32 %s12, %s19
    %p21 = scmp.eq.s32.totalorder %s20, 0
    %s23 = sadd.s32 %s22, 1
    %s24 = scalar_select %p21, %s22, %s23
    %p27 = pneg %p21
    %p28 = scmp.eq.s32.totalorder %s12, 1
    %p29 = por %p27, %p28
    %p30 = scmp.ne.s32.totalorder %s22, %s25
    %p31 = scmp.eq.s32.totalorder %s12, 0
    %p32 = por %p30, %p31
    %p33 = scmp.ne.s32.totalorder %s22, %s25
    %p34 = scmp.eq.s32.totalorder %s17, 1
    %p35 = por %p33, %p34
    %p36 = scmp.ne.s32.totalorder %s25, %s26
    %p37 = scmp.eq.s32.totalorder %s17, 0
    %p38 = por %p36, %p37
    %p39 = scmp.ne.s32.totalorder %s25, %s26
    %p40 = scmp.eq.s32.totalorder %s18, 1
    %p41 = por %p39, %p40
    %p43 = scmp.ne.s32.totalorder %s26, %s42
    %p44 = scmp.eq.s32.totalorder %s18, 0
    %p45 = por %p43, %p44
    %s46 = ssub.s32 %s12, %s19
    %p47 = scmp.eq.s32.totalorder %s46, 0
    %s49 = sadd.s32 %s48, 1
    %s50 = scalar_select %p47, %s48, %s49
    %p53 = pneg %p47
    %p54 = scmp.eq.s32.totalorder %s12, 1
    %p55 = por %p53, %p54
    %p56 = scmp.ne.s32.totalorder %s48, %s51
    %p57 = scmp.eq.s32.totalorder %s12, 0
    %p58 = por %p56, %p57
    %p59 = scmp.ne.s32.totalorder %s48, %s51
    %p60 = scmp.eq.s32.totalorder %s17, 1
    %p61 = por %p59, %p60
    %p62 = scmp.ne.s32.totalorder %s51, %s52
    %p63 = scmp.eq.s32.totalorder %s17, 0
    %p64 = por %p62, %p63
    %p65 = scmp.ne.s32.totalorder %s51, %s52
    %p66 = scmp.eq.s32.totalorder %s18, 1
    %p67 = por %p65, %p66
    %p69 = scmp.ne.s32.totalorder %s52, %s68
    %p70 = scmp.eq.s32.totalorder %s18, 0
    %p71 = por %p69, %p70
    %s73 = sadd.s32 %s72, 1
    %p76 = scmp.eq.s32.totalorder %s12, 1
    %p77 = scmp.ne.s32.totalorder %s72, %s74
    %p78 = scmp.eq.s32.totalorder %s12, 0
    %p79 = por %p77, %p78
    %p80 = scmp.ne.s32.totalorder %s72, %s74
    %p81 = scmp.eq.s32.totalorder %s17, 1
    %p82 = por %p80, %p81
    %p83 = scmp.ne.s32.totalorder %s74, %s75
    %p84 = scmp.eq.s32.totalorder %s17, 0
    %p85 = por %p83, %p84
    %p86 = scmp.ne.s32.totalorder %s74, %s75
    %p87 = scmp.eq.s32.totalorder %s18, 1
    %p88 = por %p86, %p87
    %p90 = scmp.ne.s32.totalorder %s75, %s89
    %p91 = scmp.eq.s32.totalorder %s18, 0
    %p92 = por %p90, %p91
    %s94 = sadd.s32 %s93, 1
    %p97 = scmp.eq.s32.totalorder %s12, 1
    %p98 = scmp.ne.s32.totalorder %s93, %s95
    %p99 = scmp.eq.s32.totalorder %s12, 0
    %p100 = por %p98, %p99
    %p101 = scmp.ne.s32.totalorder %s93, %s95
    %p102 = scmp.eq.s32.totalorder %s17, 1
    %p103 = por %p101, %p102
    %p104 = scmp.ne.s32.totalorder %s95, %s96
    %p105 = scmp.eq.s32.totalorder %s17, 0
    %p106 = por %p104, %p105
    %p107 = scmp.ne.s32.totalorder %s95, %s96
    %p108 = scmp.eq.s32.totalorder %s18, 1
    %p109 = por %p107, %p108
    %p111 = scmp.ne.s32.totalorder %s96, %s110
    %p112 = scmp.eq.s32.totalorder %s18, 0
    %p113 = por %p111, %p112
    %s114 = ssub.s32 %s12, %s19
    %p115 = scmp.eq.s32.totalorder %s114, 0
    %s117 = sadd.s32 %s116, 1
    %s118 = scalar_select %p115, %s116, %s117
    %p121 = pneg %p115
    %p122 = scmp.eq.s32.totalorder %s12, 1
    %p123 = por %p121, %p122
    %p124 = scmp.ne.s32.totalorder %s116, %s119
    %p125 = scmp.eq.s32.totalorder %s12, 0
    %p126 = por %p124, %p125
    %p127 = scmp.ne.s32.totalorder %s116, %s119
    %p128 = scmp.eq.s32.totalorder %s17, 1
    %p129 = por %p127, %p128
    %p130 = scmp.ne.s32.totalorder %s119, %s120
    %p131 = scmp.eq.s32.totalorder %s17, 0
    %p132 = por %p130, %p131
    %p133 = scmp.ne.s32.totalorder %s119, %s120
    %p134 = scmp.eq.s32.totalorder %s18, 1
    %p135 = por %p133, %p134
    %p137 = scmp.ne.s32.totalorder %s120, %s136
    %p138 = scmp.eq.s32.totalorder %s18, 0
    %p139 = por %p137, %p138
    %s140 = ssub.s32 %s12, %s19
    %p141 = scmp.eq.s32.totalorder %s140, 0
    %s143 = sadd.s32 %s142, 1
    %s144 = scalar_select %p141, %s142, %s143
    %p147 = pneg %p141
    %p148 = scmp.eq.s32.totalorder %s12, 1
    %p149 = por %p147, %p148
    %p150 = scmp.ne.s32.totalorder %s142, %s145
    %p151 = scmp.eq.s32.totalorder %s12, 0
    %p152 = por %p150, %p151
    %p153 = scmp.ne.s32.totalorder %s142, %s145
    %p154 = scmp.eq.s32.totalorder %s17, 1
    %p155 = por %p153, %p154
    %p156 = scmp.ne.s32.totalorder %s145, %s146
    %p157 = scmp.eq.s32.totalorder %s17, 0
    %p158 = por %p156, %p157
    %p159 = scmp.ne.s32.totalorder %s145, %s146
    %p160 = scmp.eq.s32.totalorder %s18, 1
    %p161 = por %p159, %p160
    %p163 = scmp.ne.s32.totalorder %s146, %s162
    %p164 = scmp.eq.s32.totalorder %s18, 0
    %p165 = por %p163, %p164
    %p166 = scmp.le.s32.totalorder 1, %s12
    %p167 = scmp.lt.s32.totalorder %s12, 3
    %p168 = pnand %p166, %p167
    %p169 = pneg %p168
    // Predicated region
    $region9: #{tpu_custom_call.1} parent=5 // pred_check
      _
    $region10: #{tpu_custom_call.1} parent=5 // pred_check_branch
      %171 = sbr.rel (%p168) target = $region12
    $region11: #{tpu_custom_call.1} parent=5 // pred_region
      %s172 = ssub.s32 %s12, 1
      // Predicated region
      $region13: #{tpu_custom_call.1} parent=11 // pred_check
        %p173 = pneg %p85
      $region14: #{tpu_custom_call.1} parent=11 // pred_check_branch
        %175 = sbr.rel (%p173) target = $region16
      $region15: #{tpu_custom_call.1} parent=11 // pred_region
        _
      $region16: #{tpu_custom_call.1} parent=11 // pred_fallthru
        _
      // Predicated region
      $region17: #{tpu_custom_call.1} parent=11 // pred_check
        %p176 = pneg %p106
      $region18: #{tpu_custom_call.1} parent=11 // pred_check_branch
        %178 = sbr.rel (%p176) target = $region20
      $region19: #{tpu_custom_call.1} parent=11 // pred_region
        _
      $region20: #{tpu_custom_call.1} parent=11 // pred_fallthru
        _
    $region12: #{tpu_custom_call.1} parent=5 // pred_fallthru
      _
    %p179 = scmp.lt.s32.totalorder %s12, 2
    // Predicated region
    $region21: #{tpu_custom_call.1} parent=5 // pred_check
      %p180 = pneg %p179
    $region22: #{tpu_custom_call.1} parent=5 // pred_check_branch
      %182 = sbr.rel (%p180) target = $region24
    $region23: #{tpu_custom_call.1} parent=5 // pred_region
      // Predicated region
      $region25: #{tpu_custom_call.1} parent=23 // pred_check
        %p183 = pneg %p32
      $region26: #{tpu_custom_call.1} parent=23 // pred_check_branch
        %185 = sbr.rel (%p183) target = $region28
      $region27: #{tpu_custom_call.1} parent=23 // pred_region
        %s186 = smul.u32 16, %s12
        %p187 = scmp.lt.s32.totalorder %s186, 31
        %s188 = scalar_select %p187, %s186, 31
        %s189 = smul.addr %s188, 8
        %s190 = scalar_lea.vmem %s0, %s189
        %s191 = smul.u32 16, %s12
      $region28: #{tpu_custom_call.1} parent=23 // pred_fallthru
        _
      // Predicated region
      $region29: #{tpu_custom_call.1} parent=23 // pred_check
        %p192 = pneg %p58
      $region30: #{tpu_custom_call.1} parent=23 // pred_check_branch
        %194 = sbr.rel (%p192) target = $region32
      $region31: #{tpu_custom_call.1} parent=23 // pred_region
        %s195 = smul.u32 16, %s12
        %p196 = scmp.lt.s32.totalorder %s195, 31
        %s197 = scalar_select %p196, %s195, 31
        %s198 = smul.addr %s197, 8
        %s199 = scalar_lea.vmem %s1, %s198
        %s200 = smul.u32 16, %s12
      $region32: #{tpu_custom_call.1} parent=23 // pred_fallthru
        _
    $region24: #{tpu_custom_call.1} parent=5 // pred_fallthru
      _
    %p201 = scmp.le.s32.totalorder 1, %s12
    %p202 = scmp.lt.s32.totalorder %s12, 3
    %p203 = pnand %p201, %p202
    %p204 = pneg %p203
    // Predicated region
    $region33: #{tpu_custom_call.1} parent=5 // pred_check
      _
    $region34: #{tpu_custom_call.1} parent=5 // pred_check_branch
      %206 = sbr.rel (%p203) target = $region36
    $region35: #{tpu_custom_call.1} parent=5 // pred_region
      %s207 = ssub.s32 %s12, 1
      %s208 = smul.u32 16, %s17
      %p209 = scmp.lt.s32.totalorder %s208, 31
      %s210 = scalar_select %p209, %s208, 31
      %s211 = smul.addr %s210, 8
      %s212 = scalar_lea.vmem %s0, %s211
      %p213 = pneg %p38
      %p214 = pneg %p35
      %s215 = smul.u32 16, %s17
      %p216 = scmp.lt.s32.totalorder %s215, 31
      %s217 = scalar_select %p216, %s215, 31
      %s218 = smul.addr %s217, 8
      %s219 = scalar_lea.vmem %s1, %s218
      %p220 = pneg %p64
      %p221 = pneg %p61
      %p222 = pneg %p85
      %p223 = pneg %p82
      %p224 = pneg %p106
      %p225 = pneg %p103
      %p226 = pneg %p132
      %p227 = pneg %p129
      %s228 = smul.u32 16, %s17
      %p229 = scmp.lt.s32.totalorder %s228, 31
      %s230 = scalar_select %p229, %s228, 31
      %s231 = smul.addr %s230, 4
      %s232 = scalar_lea.vmem %s4, %s231
      %p233 = pneg %p158
      %p234 = pneg %p155
      %s235 = smul.u32 16, %s17
      %p236 = scmp.lt.s32.totalorder %s235, 31
      %s237 = scalar_select %p236, %s235, 31
      %s238 = smul.addr %s237, 4
      %s239 = scalar_lea.vmem %s5, %s238
      %s240 = smul.u32 16, %s17
      %p241 = scmp.lt.s32.totalorder %s240, 31
      %s242 = scalar_select %p241, %s240, 31
      %s243 = smul.addr %s242, 8
      %s244 = scalar_lea.vmem %s0, %s243
      %s245 = smul.u32 16, %s17
      %s246 = smul.u32 16, %s17
      %p247 = scmp.lt.s32.totalorder %s246, 31
      %s248 = scalar_select %p247, %s246, 31
      %s249 = smul.addr %s248, 8
      %s250 = scalar_lea.vmem %s1, %s249
      %s251 = smul.u32 16, %s17
      %s252 = smul.u32 16, %s17
      %p253 = scmp.lt.s32.totalorder %s252, 31
      %s254 = scalar_select %p253, %s252, 31
      %s255 = smul.addr %s254, 4
      %s256 = scalar_lea.vmem %s4, %s255
      %s257 = smul.u32 16, %s17
      %s258 = smul.u32 16, %s17
      %p259 = scmp.lt.s32.totalorder %s258, 31
      %s260 = scalar_select %p259, %s258, 31
      %s261 = smul.addr %s260, 4
      %s262 = scalar_lea.vmem %s5, %s261
      %s263 = smul.u32 16, %s17
      %v265 = vld [vmem:[%s244] sm:$0xff]
      %v266 = vld [vmem:[%s244 + $0x8] sm:$0xff]
      %v267 = vld [vmem:[%s244 + $0x10] sm:$0xff]
      %v268 = vld [vmem:[%s244 + $0x18] sm:$0xff]
      %v269 = vld [vmem:[%s244 + $0x20] sm:$0xff]
      %v270 = vld [vmem:[%s244 + $0x28] sm:$0xff]
      %v271 = vld [vmem:[%s244 + $0x30] sm:$0xff]
      %v272 = vld [vmem:[%s244 + $0x38] sm:$0xff]
      %v273 = vld [vmem:[%s244 + $0x40] sm:$0xff]
      %v274 = vld [vmem:[%s244 + $0x48] sm:$0xff]
      %v275 = vld [vmem:[%s244 + $0x50] sm:$0xff]
      %v276 = vld [vmem:[%s244 + $0x58] sm:$0xff]
      %v277 = vld [vmem:[%s244 + $0x60] sm:$0xff]
      %v278 = vld [vmem:[%s244 + $0x68] sm:$0xff]
      %v279 = vld [vmem:[%s244 + $0x70] sm:$0xff]
      %v280 = vld [vmem:[%s244 + $0x78] sm:$0xff]
      %v281 = vpack.c.bf16 %v266, %v265
      %v282 = vpack.c.bf16 %v268, %v267
      %v283 = vpack.c.bf16 %v270, %v269
      %v284 = vpack.c.bf16 %v272, %v271
      %v285 = vpack.c.bf16 %v274, %v273
      %v286 = vpack.c.bf16 %v276, %v275
      %v287 = vpack.c.bf16 %v278, %v277
      %v288 = vpack.c.bf16 %v280, %v279
      %v289 = vld [vmem:[%s250] sm:$0xff]
      %v290 = vld [vmem:[%s250 + $0x8] sm:$0xff]
      %v291 = vld [vmem:[%s250 + $0x10] sm:$0xff]
      %v292 = vld [vmem:[%s250 + $0x18] sm:$0xff]
      %v293 = vld [vmem:[%s250 + $0x20] sm:$0xff]
      %v294 = vld [vmem:[%s250 + $0x28] sm:$0xff]
      %v295 = vld [vmem:[%s250 + $0x30] sm:$0xff]
      %v296 = vld [vmem:[%s250 + $0x38] sm:$0xff]
      %v297 = vld [vmem:[%s250 + $0x40] sm:$0xff]
      %v298 = vld [vmem:[%s250 + $0x48] sm:$0xff]
      %v299 = vld [vmem:[%s250 + $0x50] sm:$0xff]
      %v300 = vld [vmem:[%s250 + $0x58] sm:$0xff]
      %v301 = vld [vmem:[%s250 + $0x60] sm:$0xff]
      %v302 = vld [vmem:[%s250 + $0x68] sm:$0xff]
      %v303 = vld [vmem:[%s250 + $0x70] sm:$0xff]
      %v304 = vld [vmem:[%s250 + $0x78] sm:$0xff]
      %v305 = vpack.c.bf16 %v290, %v289
      %v306 = vpack.c.bf16 %v292, %v291
      %v307 = vpack.c.bf16 %v294, %v293
      %v308 = vpack.c.bf16 %v296, %v295
      %v309 = vpack.c.bf16 %v298, %v297
      %v310 = vpack.c.bf16 %v300, %v299
      %v311 = vpack.c.bf16 %v302, %v301
      %v312 = vpack.c.bf16 %v304, %v303
      %v313 = vld [vmem:[%s2] sm:$0xff]
      %v314 = vld [vmem:[%s2 + $0x8] sm:$0xff]
      %v315 = vld [vmem:[%s2 + $0x10] sm:$0xff]
      %v316 = vld [vmem:[%s2 + $0x18] sm:$0xff]
      %v317 = vpack.c.bf16 %v314, %v313
      %v318 = vpack.c.bf16 %v316, %v315
      %v319 = vld [vmem:[%s3] sm:$0xff]
      %v320 = vld [vmem:[%s3 + $0x8] sm:$0xff]
      %v321 = vld [vmem:[%s3 + $0x10] sm:$0xff]
      %v322 = vld [vmem:[%s3 + $0x18] sm:$0xff]
      %v323 = vpack.c.bf16 %v320, %v319
      %v324 = vpack.c.bf16 %v322, %v321
      %vm325 = vcmask 261120
      %v327 = vsel %vm325, %v281, 0
      %v330 = vsel %vm325, %v282, 0
      %v333 = vsel %vm325, %v283, 0
      %v336 = vsel %vm325, %v284, 0
      %v339 = vsel %vm325, %v285, 0
      %v342 = vsel %vm325, %v286, 0
      %v345 = vsel %vm325, %v287, 0
      %v348 = vsel %vm325, %v288, 0
      %350 = vmatprep.subr.bf16.mxu0 0
      %351 = vmatpush1.bf16.msra.mxu0 0
      %352 = vmatprep.subr.bf16.mxu0 0
      %353 = vmatpush1.bf16.msra.mxu0 0
      %354 = vmatprep.subr.bf16.mxu0 0
      %355 = vmatpush1.bf16.msra.mxu0 0
      %356 = vmatprep.subr.bf16.mxu0 0
      %357 = vmatpush1.bf16.msra.mxu0 0
      %358 = vmatprep.subr.bf16.mxu0 0
      %359 = vmatpush1.bf16.msra.mxu0 0
      %360 = vmatprep.subr.bf16.mxu0 0
      %361 = vmatpush1.bf16.msra.mxu0 0
      %362 = vmatprep.subr.bf16.mxu0 0
      %363 = vmatpush1.bf16.msra.mxu0 %v318
      %364 = vmatprep.subr.bf16.mxu0 0
      %365 = vmatpush1.bf16.msra.mxu0 %v317
      %366 = vmatprep.subr.bf16.mxu0 0
      %367 = vmatpush2.bf16.msra.mxu0 0
      %368 = vmatprep.subr.bf16.mxu0 0
      %369 = vmatpush2.bf16.msra.mxu0 0
      %370 = vmatprep.subr.bf16.mxu0 0
      %371 = vmatpush2.bf16.msra.mxu0 0
      %372 = vmatprep.subr.bf16.mxu0 0
      %373 = vmatpush2.bf16.msra.mxu0 0
      %374 = vmatprep.subr.bf16.mxu0 0
      %375 = vmatpush2.bf16.msra.mxu0 0
      %376 = vmatprep.subr.bf16.mxu0 0
      %377 = vmatpush2.bf16.msra.mxu0 0
      %378 = vmatprep.subr.bf16.mxu0 0
      %379 = vmatpush2.bf16.msra.mxu0 0
      %380 = vmatprep.subr.bf16.mxu0 0
      %381 = vmatpush2.bf16.msra.mxu0 0
      %382 = vmatprep.mubr.bf16.mxu0 0
      %383 = vmatmul.mubr.bf16.gmra.mxu0 %v327
      %v384 = vpop.f32.mrf.mxu0
      %v385 = vadd.f32 0.0, %v384
      %v386 = vpop.f32.mrf.mxu0
      %v387 = vpop.f32.mrf.mxu0
      %v388 = vadd.f32 0.0, %v387
      %v389 = vpop.f32.mrf.mxu0
      %390 = vmatprep.mubr.bf16.mxu0 0
      %391 = vmatmul.mubr.bf16.gmra.mxu0 %v330
      %v392 = vpop.f32.mrf.mxu0
      %v393 = vadd.f32 0.0, %v392
      %v394 = vpop.f32.mrf.mxu0
      %v395 = vpop.f32.mrf.mxu0
      %v396 = vadd.f32 0.0, %v395
      %v397 = vpop.f32.mrf.mxu0
      %398 = vmatprep.mubr.bf16.mxu0 0
      %399 = vmatmul.mubr.bf16.gmra.mxu0 %v333
      %v400 = vpop.f32.mrf.mxu0
      %v401 = vadd.f32 0.0, %v400
      %v402 = vpop.f32.mrf.mxu0
      %v403 = vpop.f32.mrf.mxu0
      %v404 = vadd.f32 0.0, %v403
      %v405 = vpop.f32.mrf.mxu0
      %406 = vmatprep.mubr.bf16.mxu0 0
      %407 = vmatmul.mubr.bf16.gmra.mxu0 %v336
      %v408 = vpop.f32.mrf.mxu0
      %v409 = vadd.f32 0.0, %v408
      %v410 = vpop.f32.mrf.mxu0
      %v411 = vpop.f32.mrf.mxu0
      %v412 = vadd.f32 0.0, %v411
      %v413 = vpop.f32.mrf.mxu0
      %414 = vmatprep.mubr.bf16.mxu0 0
      %415 = vmatmul.mubr.bf16.gmra.mxu0 %v339
      %v416 = vpop.f32.mrf.mxu0
      %v417 = vadd.f32 0.0, %v416
      %v418 = vpop.f32.mrf.mxu0
      %v419 = vpop.f32.mrf.mxu0
      %v420 = vadd.f32 0.0, %v419
      %v421 = vpop.f32.mrf.mxu0
      %422 = vmatprep.mubr.bf16.mxu0 0
      %423 = vmatmul.mubr.bf16.gmra.mxu0 %v342
      %v424 = vpop.f32.mrf.mxu0
      %v425 = vadd.f32 0.0, %v424
      %v426 = vpop.f32.mrf.mxu0
      %v427 = vpop.f32.mrf.mxu0
      %v428 = vadd.f32 0.0, %v427
      %v429 = vpop.f32.mrf.mxu0
      %430 = vmatprep.mubr.bf16.mxu0 0
      %431 = vmatmul.mubr.bf16.gmra.mxu0 %v345
      %v432 = vpop.f32.mrf.mxu0
      %v433 = vadd.f32 0.0, %v432
      %v434 = vpop.f32.mrf.mxu0
      %v435 = vpop.f32.mrf.mxu0
      %v436 = vadd.f32 0.0, %v435
      %v437 = vpop.f32.mrf.mxu0
      %438 = vmatprep.mubr.bf16.mxu0 0
      %439 = vmatmul.mubr.bf16.gmra.mxu0 %v348
      %v440 = vpop.f32.mrf.mxu0
      %v441 = vadd.f32 0.0, %v440
      %v442 = vpop.f32.mrf.mxu0
      %v443 = vpop.f32.mrf.mxu0
      %v444 = vadd.f32 0.0, %v443
      %v445 = vpop.f32.mrf.mxu0
      %446 = vdwg.mxu0
      %v447 = vpack.c.bf16 %v388, %v385
      %v448 = vpack.c.bf16 %v396, %v393
      %v449 = vpack.c.bf16 %v404, %v401
      %v450 = vpack.c.bf16 %v412, %v409
      %v451 = vpack.c.bf16 %v420, %v417
      %v452 = vpack.c.bf16 %v428, %v425
      %v453 = vpack.c.bf16 %v436, %v433
      %v454 = vpack.c.bf16 %v444, %v441
      %v463 = vunpack.c.l.b16 %v447
      %v464 = vunpack.c.h.b16 %v447
      %v465 = vunpack.c.l.b16 %v448
      %v466 = vunpack.c.h.b16 %v448
      %v467 = vunpack.c.l.b16 %v449
      %v468 = vunpack.c.h.b16 %v449
      %v469 = vunpack.c.l.b16 %v450
      %v470 = vunpack.c.h.b16 %v450
      %v471 = vunpack.c.l.b16 %v451
      %v472 = vunpack.c.h.b16 %v451
      %v473 = vunpack.c.l.b16 %v452
      %v474 = vunpack.c.h.b16 %v452
      %v475 = vunpack.c.l.b16 %v453
      %v476 = vunpack.c.h.b16 %v453
      %v477 = vunpack.c.l.b16 %v454
      %v478 = vunpack.c.h.b16 %v454
      %v479 = vpack.c.b16 %v463, %v463
      %v480 = vpack.c.b16 %v464, %v464
      %v481 = vpack.c.b16 %v465, %v465
      %v482 = vpack.c.b16 %v466, %v466
      %v483 = vpack.c.b16 %v467, %v467
      %v484 = vpack.c.b16 %v468, %v468
      %v485 = vpack.c.b16 %v469, %v469
      %v486 = vpack.c.b16 %v470, %v470
      %v487 = vpack.c.b16 %v471, %v471
      %v488 = vpack.c.b16 %v472, %v472
      %v489 = vpack.c.b16 %v473, %v473
      %v490 = vpack.c.b16 %v474, %v474
      %v491 = vpack.c.b16 %v475, %v475
      %v492 = vpack.c.b16 %v476, %v476
      %v493 = vpack.c.b16 %v477, %v477
      %v494 = vpack.c.b16 %v478, %v478
      %vm511 = vcmask 519168
      %512 = vst.msk [vmem:[%s256] sm:$0xf] %vm511, %v479
      %513 = vst.msk [vmem:[%s256 + $0x4] sm:$0xf] %vm511, %v480
      %514 = vst.msk [vmem:[%s256 + $0x8] sm:$0xf] %vm511, %v481
      %515 = vst.msk [vmem:[%s256 + $0xc] sm:$0xf] %vm511, %v482
      %516 = vst.msk [vmem:[%s256 + $0x10] sm:$0xf] %vm511, %v483
      %517 = vst.msk [vmem:[%s256 + $0x14] sm:$0xf] %vm511, %v484
      %518 = vst.msk [vmem:[%s256 + $0x18] sm:$0xf] %vm511, %v485
      %519 = vst.msk [vmem:[%s256 + $0x1c] sm:$0xf] %vm511, %v486
      %520 = vst.msk [vmem:[%s256 + $0x20] sm:$0xf] %vm511, %v487
      %521 = vst.msk [vmem:[%s256 + $0x24] sm:$0xf] %vm511, %v488
      %522 = vst.msk [vmem:[%s256 + $0x28] sm:$0xf] %vm511, %v489
      %523 = vst.msk [vmem:[%s256 + $0x2c] sm:$0xf] %vm511, %v490
      %524 = vst.msk [vmem:[%s256 + $0x30] sm:$0xf] %vm511, %v491
      %525 = vst.msk [vmem:[%s256 + $0x34] sm:$0xf] %vm511, %v492
      %526 = vst.msk [vmem:[%s256 + $0x38] sm:$0xf] %vm511, %v493
      %527 = vst.msk [vmem:[%s256 + $0x3c] sm:$0xf] %vm511, %v494
      %v529 = vsel %vm325, %v305, 0
      %v532 = vsel %vm325, %v306, 0
      %v535 = vsel %vm325, %v307, 0
      %v538 = vsel %vm325, %v308, 0
      %v541 = vsel %vm325, %v309, 0
      %v544 = vsel %vm325, %v310, 0
      %v547 = vsel %vm325, %v311, 0
      %v550 = vsel %vm325, %v312, 0
      %552 = vmatprep.subr.bf16.mxu0 0
      %553 = vmatpush1.bf16.msra.mxu0 0
      %554 = vmatprep.subr.bf16.mxu0 0
      %555 = vmatpush1.bf16.msra.mxu0 0
      %556 = vmatprep.subr.bf16.mxu0 0
      %557 = vmatpush1.bf16.msra.mxu0 0
      %558 = vmatprep.subr.bf16.mxu0 0
      %559 = vmatpush1.bf16.msra.mxu0 0
      %560 = vmatprep.subr.bf16.mxu0 0
      %561 = vmatpush1.bf16.msra.mxu0 0
      %562 = vmatprep.subr.bf16.mxu0 0
      %563 = vmatpush1.bf16.msra.mxu0 0
      %564 = vmatprep.subr.bf16.mxu0 0
      %565 = vmatpush1.bf16.msra.mxu0 %v324
      %566 = vmatprep.subr.bf16.mxu0 0
      %567 = vmatpush1.bf16.msra.mxu0 %v323
      %568 = vmatprep.subr.bf16.mxu0 0
      %569 = vmatpush2.bf16.msra.mxu0 0
      %570 = vmatprep.subr.bf16.mxu0 0
      %571 = vmatpush2.bf16.msra.mxu0 0
      %572 = vmatprep.subr.bf16.mxu0 0
      %573 = vmatpush2.bf16.msra.mxu0 0
      %574 = vmatprep.subr.bf16.mxu0 0
      %575 = vmatpush2.bf16.msra.mxu0 0
      %576 = vmatprep.subr.bf16.mxu0 0
      %577 = vmatpush2.bf16.msra.mxu0 0
      %578 = vmatprep.subr.bf16.mxu0 0
      %579 = vmatpush2.bf16.msra.mxu0 0
      %580 = vmatprep.subr.bf16.mxu0 0
      %581 = vmatpush2.bf16.msra.mxu0 0
      %582 = vmatprep.subr.bf16.mxu0 0
      %583 = vmatpush2.bf16.msra.mxu0 0
      %584 = vmatprep.mubr.bf16.mxu0 0
      %585 = vmatmul.mubr.bf16.gmra.mxu0 %v529
      %v586 = vpop.f32.mrf.mxu0
      %v587 = vadd.f32 0.0, %v586
      %v588 = vpop.f32.mrf.mxu0
      %v589 = vpop.f32.mrf.mxu0
      %v590 = vadd.f32 0.0, %v589
      %v591 = vpop.f32.mrf.mxu0
      %592 = vmatprep.mubr.bf16.mxu0 0
      %593 = vmatmul.mubr.bf16.gmra.mxu0 %v532
      %v594 = vpop.f32.mrf.mxu0
      %v595 = vadd.f32 0.0, %v594
      %v596 = vpop.f32.mrf.mxu0
      %v597 = vpop.f32.mrf.mxu0
      %v598 = vadd.f32 0.0, %v597
      %v599 = vpop.f32.mrf.mxu0
      %600 = vmatprep.mubr.bf16.mxu0 0
      %601 = vmatmul.mubr.bf16.gmra.mxu0 %v535
      %v602 = vpop.f32.mrf.mxu0
      %v603 = vadd.f32 0.0, %v602
      %v604 = vpop.f32.mrf.mxu0
      %v605 = vpop.f32.mrf.mxu0
      %v606 = vadd.f32 0.0, %v605
      %v607 = vpop.f32.mrf.mxu0
      %608 = vmatprep.mubr.bf16.mxu0 0
      %609 = vmatmul.mubr.bf16.gmra.mxu0 %v538
      %v610 = vpop.f32.mrf.mxu0
      %v611 = vadd.f32 0.0, %v610
      %v612 = vpop.f32.mrf.mxu0
      %v613 = vpop.f32.mrf.mxu0
      %v614 = vadd.f32 0.0, %v613
      %v615 = vpop.f32.mrf.mxu0
      %616 = vmatprep.mubr.bf16.mxu0 0
      %617 = vmatmul.mubr.bf16.gmra.mxu0 %v541
      %v618 = vpop.f32.mrf.mxu0
      %v619 = vadd.f32 0.0, %v618
      %v620 = vpop.f32.mrf.mxu0
      %v621 = vpop.f32.mrf.mxu0
      %v622 = vadd.f32 0.0, %v621
      %v623 = vpop.f32.mrf.mxu0
      %624 = vmatprep.mubr.bf16.mxu0 0
      %625 = vmatmul.mubr.bf16.gmra.mxu0 %v544
      %v626 = vpop.f32.mrf.mxu0
      %v627 = vadd.f32 0.0, %v626
      %v628 = vpop.f32.mrf.mxu0
      %v629 = vpop.f32.mrf.mxu0
      %v630 = vadd.f32 0.0, %v629
      %v631 = vpop.f32.mrf.mxu0
      %632 = vmatprep.mubr.bf16.mxu0 0
      %633 = vmatmul.mubr.bf16.gmra.mxu0 %v547
      %v634 = vpop.f32.mrf.mxu0
      %v635 = vadd.f32 0.0, %v634
      %v636 = vpop.f32.mrf.mxu0
      %v637 = vpop.f32.mrf.mxu0
      %v638 = vadd.f32 0.0, %v637
      %v639 = vpop.f32.mrf.mxu0
      %640 = vmatprep.mubr.bf16.mxu0 0
      %641 = vmatmul.mubr.bf16.gmra.mxu0 %v550
      %v642 = vpop.f32.mrf.mxu0
      %v643 = vadd.f32 0.0, %v642
      %v644 = vpop.f32.mrf.mxu0
      %v645 = vpop.f32.mrf.mxu0
      %v646 = vadd.f32 0.0, %v645
      %v647 = vpop.f32.mrf.mxu0
      %648 = vdwg.mxu0
      %v649 = vpack.c.bf16 %v590, %v587
      %v650 = vpack.c.bf16 %v598, %v595
      %v651 = vpack.c.bf16 %v606, %v603
      %v652 = vpack.c.bf16 %v614, %v611
      %v653 = vpack.c.bf16 %v622, %v619
      %v654 = vpack.c.bf16 %v630, %v627
      %v655 = vpack.c.bf16 %v638, %v635
      %v656 = vpack.c.bf16 %v646, %v643
      %v665 = vunpack.c.l.b16 %v649
      %v666 = vunpack.c.h.b16 %v649
      %v667 = vunpack.c.l.b16 %v650
      %v668 = vunpack.c.h.b16 %v650
      %v669 = vunpack.c.l.b16 %v651
      %v670 = vunpack.c.h.b16 %v651
      %v671 = vunpack.c.l.b16 %v652
      %v672 = vunpack.c.h.b16 %v652
      %v673 = vunpack.c.l.b16 %v653
      %v674 = vunpack.c.h.b16 %v653
      %v675 = vunpack.c.l.b16 %v654
      %v676 = vunpack.c.h.b16 %v654
      %v677 = vunpack.c.l.b16 %v655
      %v678 = vunpack.c.h.b16 %v655
      %v679 = vunpack.c.l.b16 %v656
      %v680 = vunpack.c.h.b16 %v656
      %v681 = vpack.c.b16 %v665, %v665
      %v682 = vpack.c.b16 %v666, %v666
      %v683 = vpack.c.b16 %v667, %v667
      %v684 = vpack.c.b16 %v668, %v668
      %v685 = vpack.c.b16 %v669, %v669
      %v686 = vpack.c.b16 %v670, %v670
      %v687 = vpack.c.b16 %v671, %v671
      %v688 = vpack.c.b16 %v672, %v672
      %v689 = vpack.c.b16 %v673, %v673
      %v690 = vpack.c.b16 %v674, %v674
      %v691 = vpack.c.b16 %v675, %v675
      %v692 = vpack.c.b16 %v676, %v676
      %v693 = vpack.c.b16 %v677, %v677
      %v694 = vpack.c.b16 %v678, %v678
      %v695 = vpack.c.b16 %v679, %v679
      %v696 = vpack.c.b16 %v680, %v680
      %713 = vst.msk [vmem:[%s262] sm:$0xf] %vm511, %v681
      %714 = vst.msk [vmem:[%s262 + $0x4] sm:$0xf] %vm511, %v682
      %715 = vst.msk [vmem:[%s262 + $0x8] sm:$0xf] %vm511, %v683
      %716 = vst.msk [vmem:[%s262 + $0xc] sm:$0xf] %vm511, %v684
      %717 = vst.msk [vmem:[%s262 + $0x10] sm:$0xf] %vm511, %v685
      %718 = vst.msk [vmem:[%s262 + $0x14] sm:$0xf] %vm511, %v686
      %719 = vst.msk [vmem:[%s262 + $0x18] sm:$0xf] %vm511, %v687
      %720 = vst.msk [vmem:[%s262 + $0x1c] sm:$0xf] %vm511, %v688
      %721 = vst.msk [vmem:[%s262 + $0x20] sm:$0xf] %vm511, %v689
      %722 = vst.msk [vmem:[%s262 + $0x24] sm:$0xf] %vm511, %v690
      %723 = vst.msk [vmem:[%s262 + $0x28] sm:$0xf] %vm511, %v691
      %724 = vst.msk [vmem:[%s262 + $0x2c] sm:$0xf] %vm511, %v692
      %725 = vst.msk [vmem:[%s262 + $0x30] sm:$0xf] %vm511, %v693
      %726 = vst.msk [vmem:[%s262 + $0x34] sm:$0xf] %vm511, %v694
      %727 = vst.msk [vmem:[%s262 + $0x38] sm:$0xf] %vm511, %v695
      %728 = vst.msk [vmem:[%s262 + $0x3c] sm:$0xf] %vm511, %v696
      %s729 = smul.u32 16, %s17
      %p730 = scmp.lt.s32.totalorder %s729, 31
      %s731 = scalar_select %p730, %s729, 31
      %s732 = smul.addr %s731, 4
      %s733 = scalar_lea.vmem %s4, %s732
      %s734 = smul.u32 16, %s17
      %p735 = scmp.lt.s32.totalorder %s734, 31
      %s736 = scalar_select %p735, %s734, 31
      %s737 = smul.addr %s736, 4
      %s738 = scalar_lea.vmem %s5, %s737
      // Predicated region
      $region37: #{tpu_custom_call.1} parent=35 // pred_check
        %p739 = pneg %p129
      $region38: #{tpu_custom_call.1} parent=35 // pred_check_branch
        %741 = sbr.rel (%p739) target = $region40
      $region39: #{tpu_custom_call.1} parent=35 // pred_region
        %s742 = smul.u32 16, %s17
      $region40: #{tpu_custom_call.1} parent=35 // pred_fallthru
        _
      // Predicated region
      $region41: #{tpu_custom_call.1} parent=35 // pred_check
        %p743 = pneg %p155
      $region42: #{tpu_custom_call.1} parent=35 // pred_check_branch
        %745 = sbr.rel (%p743) target = $region44
      $region43: #{tpu_custom_call.1} parent=35 // pred_region
        %s746 = smul.u32 16, %s17
      $region44: #{tpu_custom_call.1} parent=35 // pred_fallthru
        _
    $region36: #{tpu_custom_call.1} parent=5 // pred_fallthru
      _
    %p747 = scmp.le.s32.totalorder 2, %s12
    // Predicated region
    $region45: #{tpu_custom_call.1} parent=5 // pred_check
      %p748 = pneg %p747
    $region46: #{tpu_custom_call.1} parent=5 // pred_check_branch
      %750 = sbr.rel (%p748) target = $region48
    $region47: #{tpu_custom_call.1} parent=5 // pred_region
      %s751 = ssub.s32 %s12, 2
      // Predicated region
      $region49: #{tpu_custom_call.1} parent=47 // pred_check
        %p752 = pneg %p135
      $region50: #{tpu_custom_call.1} parent=47 // pred_check_branch
        %754 = sbr.rel (%p752) target = $region52
      $region51: #{tpu_custom_call.1} parent=47 // pred_region
        %s755 = smul.u32 16, %s18
        %p756 = scmp.lt.s32.totalorder %s755, 31
        %s757 = scalar_select %p756, %s755, 31
        %s758 = smul.addr %s757, 4
        %s759 = scalar_lea.vmem %s4, %s758
      $region52: #{tpu_custom_call.1} parent=47 // pred_fallthru
        _
      // Predicated region
      $region53: #{tpu_custom_call.1} parent=47 // pred_check
        %p760 = pneg %p161
      $region54: #{tpu_custom_call.1} parent=47 // pred_check_branch
        %762 = sbr.rel (%p760) target = $region56
      $region55: #{tpu_custom_call.1} parent=47 // pred_region
        %s763 = smul.u32 16, %s18
        %p764 = scmp.lt.s32.totalorder %s763, 31
        %s765 = scalar_select %p764, %s763, 31
        %s766 = smul.addr %s765, 4
        %s767 = scalar_lea.vmem %s5, %s766
      $region56: #{tpu_custom_call.1} parent=47 // pred_fallthru
        _
    $region48: #{tpu_custom_call.1} parent=5 // pred_fallthru
      _
  $region6: #{tpu_custom_call.1} parent=0 // loop_footer
    %s16 = sadd.s32 1, %s12
  $region7: #{tpu_custom_call.1} parent=0 // loop_footer_branch
    %11 = sbr.rel target = $region3
  $region8: #{tpu_custom_call.1} parent=0 // loop_exit
    _

</llo_original>
